<compile_context>
chip_gen: v6e
topology: v6e:2x2x1
jax: 0.10.0
libtpu: 0.0.40
codegen_flags: <defaults>
</compile_context>

<pallas_src>
import math

import jax
import jax.numpy as jnp
from jax.experimental import pallas as pl
from jax.experimental.pallas import tpu as pltpu


def _round_up(a: int, b: int) -> int:
    return ((a + b - 1) // b) * b


def cyclic_embedding_kernel(x_ref, w_sin_ref, w_cos_ref, b_ref, o_ref):
    # x_ref: (TN, 1), w_sin/w_cos/b: (1, Ep), o_ref: (TN, Ep)
    x = x_ref[...] * (2.0 * math.pi)          # (TN, 1)
    s = jnp.sin(x)                            # (TN, 1)  EUP
    c = jnp.cos(x)                            # (TN, 1)  EUP
    # Broadcast outer products on the VPU (no K=2 MXU contraction):
    # (TN, 1) * (1, Ep) -> (TN, Ep); stores are lane-dense since Ep % 128 == 0.
    o_ref[...] = s * w_sin_ref[...] + c * w_cos_ref[...] + b_ref[...]


def cyclic_embedding(x, weight, bias):
    """x: (B, S, 1) float32; weight: (E, 2); bias: (E,) -> (B, S, E) float32."""
    B, S, _ = x.shape
    E = weight.shape[0]
    N = B * S

    # Pad the embedding dim to a lane-dense multiple of 128.
    Ep = _round_up(E, 128)

    # Row-tile size: target ~2 MiB output tiles (double-buffered input+output
    # then sits well under every generation's scoped VMEM default), capped at
    # 2048 rows, floored at 8 (sublane multiple).
    cap = (2 * 1024 * 1024) // (Ep * 4)
    cap = max(8, min(2048, (cap // 8) * 8))
    TN = min(cap, _round_up(N, 8))
    Np = _round_up(N, TN)
    grid = (Np // TN,)

    # Prepare operands.
    x_flat = x.reshape(N, 1).astype(jnp.float32)
    if Np != N:
        x_flat = jnp.pad(x_flat, ((0, Np - N), (0, 0)))

    w = weight.astype(jnp.float32)                                   # (E, 2)
    w_sin = jnp.pad(w[:, 0], (0, Ep - E)).reshape(1, Ep)             # (1, Ep)
    w_cos = jnp.pad(w[:, 1], (0, Ep - E)).reshape(1, Ep)             # (1, Ep)
    b_row = jnp.pad(bias.astype(jnp.float32), (0, Ep - E)).reshape(1, Ep)

    out_padded = pl.pallas_call(
        cyclic_embedding_kernel,
        out_shape=jax.ShapeDtypeStruct((Np, Ep), jnp.float32),
        grid=grid,
        in_specs=[
            pl.BlockSpec((TN, 1), lambda i: (i, 0)),   # x rows (tiled)
            pl.BlockSpec((1, Ep), lambda i: (0, 0)),   # sin weights (resident)
            pl.BlockSpec((1, Ep), lambda i: (0, 0)),   # cos weights (resident)
            pl.BlockSpec((1, Ep), lambda i: (0, 0)),   # bias (resident)
        ],
        out_specs=pl.BlockSpec((TN, Ep), lambda i: (i, 0)),
        compiler_params=pltpu.CompilerParams(
            dimension_semantics=("parallel",),
        ),
    )(x_flat, w_sin, w_cos, b_row)

    return out_padded[:N, :E].reshape(B, S, E)


if __name__ == "__main__":
    key = jax.random.PRNGKey(0)
    k_x, k_w, k_b = jax.random.split(key, 3)

    B, S, E = 2, 8, 32

    # Input: cyclic features scaled to [0, 1], shape (B, S, 1).
    x = jax.random.uniform(k_x, (B, S, 1), dtype=jnp.float32)

    # nn.Linear(2, E) init: U(-1/sqrt(2), 1/sqrt(2)) for weight (E, 2) and bias (E,).
    bound = 1.0 / math.sqrt(2.0)
    weight = jax.random.uniform(k_w, (E, 2), minval=-bound, maxval=bound,
                                dtype=jnp.float32)
    bias = jax.random.uniform(k_b, (E,), minval=-bound, maxval=bound,
                              dtype=jnp.float32)

    out = cyclic_embedding(x, weight, bias)
    out = jax.block_until_ready(out)

    # Pure-JAX reference.
    xr = x * 2.0 * math.pi
    emb = jnp.concatenate([jnp.sin(xr), jnp.cos(xr)], axis=-1)     # (B, S, 2)
    ref = emb @ weight.T + bias                                    # (B, S, E)
    assert out.shape == (B, S, E)
    assert jnp.allclose(out, ref, atol=1e-5, rtol=1e-5)

    print("KERNEL_OK")
</pallas_src>

<mosaic_0001>
module attributes {stable_mosaic.version = 11 : i64} {
  func.func @cyclic_embedding_kernel(%arg0: i32, %arg1: memref<16x1xf32, #tpu.memory_space<vmem>>, %arg2: memref<1x128xf32, #tpu.memory_space<vmem>>, %arg3: memref<1x128xf32, #tpu.memory_space<vmem>>, %arg4: memref<1x128xf32, #tpu.memory_space<vmem>>, %arg5: memref<16x128xf32, #tpu.memory_space<vmem>>) attributes {dimension_semantics = [#tpu.dimension_semantics<parallel>], iteration_bounds = array<i64: 1>, scalar_prefetch = 0 : i64, scratch_operands = 0 : i64, tpu.core_type = #tpu.core_type<tc>, window_params = [{transform_indices = @transform_0, window_bounds = array<i64: 16, 1>}, {pipeline_mode = #tpu.pipeline_mode<synchronous>, transform_indices = @transform_1, window_bounds = array<i64: 1, 128>}, {pipeline_mode = #tpu.pipeline_mode<synchronous>, transform_indices = @transform_2, window_bounds = array<i64: 1, 128>}, {pipeline_mode = #tpu.pipeline_mode<synchronous>, transform_indices = @transform_3, window_bounds = array<i64: 1, 128>}, {transform_indices = @transform_4, window_bounds = array<i64: 16, 128>}]} {
    %c0 = arith.constant 0 : index
    %c0_0 = arith.constant 0 : index
    %0 = vector.load %arg1[%c0, %c0_0] : memref<16x1xf32, #tpu.memory_space<vmem>>, vector<16x1xf32>
    %cst = arith.constant 6.28318548 : f32
    %1 = vector.broadcast %cst : f32 to vector<16x1xf32>
    %2 = arith.mulf %0, %1 : vector<16x1xf32>
    %3 = math.sin %2 : vector<16x1xf32>
    %4 = math.cos %2 : vector<16x1xf32>
    %c0_1 = arith.constant 0 : index
    %c0_2 = arith.constant 0 : index
    %5 = vector.load %arg2[%c0_1, %c0_2] : memref<1x128xf32, #tpu.memory_space<vmem>>, vector<1x128xf32>
    %6 = vector.broadcast %3 : vector<16x1xf32> to vector<16x128xf32>
    %7 = vector.broadcast %5 : vector<1x128xf32> to vector<16x128xf32>
    %8 = arith.mulf %6, %7 : vector<16x128xf32>
    %c0_3 = arith.constant 0 : index
    %c0_4 = arith.constant 0 : index
    %9 = vector.load %arg3[%c0_3, %c0_4] : memref<1x128xf32, #tpu.memory_space<vmem>>, vector<1x128xf32>
    %10 = vector.broadcast %4 : vector<16x1xf32> to vector<16x128xf32>
    %11 = vector.broadcast %9 : vector<1x128xf32> to vector<16x128xf32>
    %12 = arith.mulf %10, %11 : vector<16x128xf32>
    %13 = arith.addf %8, %12 : vector<16x128xf32>
    %c0_5 = arith.constant 0 : index
    %c0_6 = arith.constant 0 : index
    %14 = vector.load %arg4[%c0_5, %c0_6] : memref<1x128xf32, #tpu.memory_space<vmem>>, vector<1x128xf32>
    %15 = vector.broadcast %14 : vector<1x128xf32> to vector<16x128xf32>
    %16 = arith.addf %13, %15 : vector<16x128xf32>
    %c0_7 = arith.constant 0 : index
    %c0_8 = arith.constant 0 : index
    %17 = vector.load %arg5[%c0_7, %c0_8] : memref<16x128xf32, #tpu.memory_space<vmem>>, vector<16x128xf32>
    tpu.vector_store %arg5[%c0_7, %c0_8], %16 {strides = array<i32>} : memref<16x128xf32, #tpu.memory_space<vmem>>, vector<16x128xf32>,
    return
  }
  func.func @transform_0(%arg0: i32) -> (i32, i32) {
    %c0_i32 = arith.constant 0 : i32
    %c0_i32_0 = arith.constant 0 : i32
    return %arg0, %c0_i32 : i32, i32
  }
  func.func @transform_1(%arg0: i32) -> (i32, i32) {
    %c0_i32 = arith.constant 0 : i32
    %c0_i32_0 = arith.constant 0 : i32
    %c0_i32_1 = arith.constant 0 : i32
    return %c0_i32, %c0_i32_0 : i32, i32
  }
  func.func @transform_2(%arg0: i32) -> (i32, i32) {
    %c0_i32 = arith.constant 0 : i32
    %c0_i32_0 = arith.constant 0 : i32
    %c0_i32_1 = arith.constant 0 : i32
    return %c0_i32, %c0_i32_0 : i32, i32
  }
  func.func @transform_3(%arg0: i32) -> (i32, i32) {
    %c0_i32 = arith.constant 0 : i32
    %c0_i32_0 = arith.constant 0 : i32
    %c0_i32_1 = arith.constant 0 : i32
    return %c0_i32, %c0_i32_0 : i32, i32
  }
  func.func @transform_4(%arg0: i32) -> (i32, i32) {
    %c0_i32 = arith.constant 0 : i32
    %c0_i32_0 = arith.constant 0 : i32
    return %arg0, %c0_i32 : i32, i32
  }
}

</mosaic_0001>

<llo_original>
// kernel: tpu_custom_call.1
$region0: #{tpu_custom_call.1}
  #allocation0 [shape = 'u32[]', space=smem, size = 0x4, offset = 0x4, fixed_abs, tag = 'smem constant byte address 0x4 - core index']
  #allocation1 [shape = 'u32[144,128]{1,0:T(1,128)}', space=vmem, size = 0x12000, scoped, tag = 'internal scratch']
  %s0 = inlined_call_operand.vmem [shape: f32[16,1], index: 0, kind: input, shape index: {}]
  %s1 = inlined_call_operand.vmem [shape: f32[1,128], index: 1, kind: input, shape index: {}]
  %s2 = inlined_call_operand.vmem [shape: f32[1,128], index: 2, kind: input, shape index: {}]
  %s3 = inlined_call_operand.vmem [shape: f32[1,128], index: 3, kind: input, shape index: {}]
  %s4 = inlined_call_operand.hbm [shape: f32[16,128], index: 4, kind: output, shape index: {}]
  %s5 = sld [smem:[#allocation0]]
  $region26: #{tpu_custom_call.1} parent=0
    _
  %s7 = ssub.s32 1, %s5
  %s8 = scalar_select 0, %s7, %s5
  $region1: #{tpu_custom_call.1} parent=0
    #allocation2 [shape = 'u8[8192]{0}', space=vmem, size = 0x2000, scoped, tag = 'output window, operand 0, single buffered']
    #allocation3 [shape = 's32[1]{0}', space=sflag, size = 0x4, scoped, tag = 'scoped memory for tpu_custom_call.1']
    %9 = vsyncpa [#allocation3], 0
    // Predicated region
    $region2: #{tpu_custom_call.1} parent=1 // pred_check
      _
    $region3: #{tpu_custom_call.1} parent=1 // pred_check_branch
      %11 = sbr.rel (0) target = $region5
    $region4: #{tpu_custom_call.1} parent=1 // pred_region
      _
    $region5: #{tpu_custom_call.1} parent=1 // pred_fallthru
      _
    // Predicated region
    $region6: #{tpu_custom_call.1} parent=1 // pred_check
      _
    $region7: #{tpu_custom_call.1} parent=1 // pred_check_branch
      %13 = sbr.rel (0) target = $region9
    $region8: #{tpu_custom_call.1} parent=1 // pred_region
      _
    $region9: #{tpu_custom_call.1} parent=1 // pred_fallthru
      _
    // Predicated region
    $region10: #{tpu_custom_call.1} parent=1 // pred_check
      _
    $region11: #{tpu_custom_call.1} parent=1 // pred_check_branch
      %15 = sbr.rel (0) target = $region13
    $region12: #{tpu_custom_call.1} parent=1 // pred_region
      _
    $region13: #{tpu_custom_call.1} parent=1 // pred_fallthru
      _
    // Predicated region
    $region14: #{tpu_custom_call.1} parent=1 // pred_check
      _
    $region15: #{tpu_custom_call.1} parent=1 // pred_check_branch
      %17 = sbr.rel (0) target = $region17
    $region16: #{tpu_custom_call.1} parent=1 // pred_region
      _
    $region17: #{tpu_custom_call.1} parent=1 // pred_fallthru
      _
    %v18 = vld [vmem:[%s0] sm:$0xff]
    %v19 = vld [vmem:[%s0 + $0x8] sm:$0xff]
    %v20 = vmul.f32 %v18, 6.2831855
    %v21 = vmul.f32 %v19, 6.2831855
    %v22 = vand.u32 2147483647, %v20
    %vm23 = vcmp.le.f32.partialorder %v22, 0.7853982
    %vm24 = vcmp.lt.s32.totalorder %v20, 0
    %v25 = vand.u32 %v20, 2139095040
    %v26 = vshrl.u32 %v25, 23
    %v27 = vsub.s32 %v26, 127
    %v28 = vand.u32 2147483647, %v20
    %v29 = vand.u32 %v28, 8388607
    %v30 = vor.u32 %v29, 8388608
    %v31 = vsub.s32 0, %v30
    %v32 = vadd.s32 %v27, 1
    %vm33 = vcmp.gt.s32.totalorder %v32, 0
    %v34 = vsel %vm33, %v32, 0
    %v35 = vshrl.u32 %v34, 5
    %v36 = vand.u32 %v34, 31
    %v37 = vsub.s32 32, %v36
    %v38 = vshrl.u32 683565275, %v37
    %v39 = vshll.u32 683565275, %v36
    %v40 = vshrl.u32 2475754826, %v37
    %v41 = vor.u32 %v39, %v40
    %v42 = vshll.u32 2475754826, %v36
    %v43 = vshrl.u32 2131351028, %v37
    %v44 = vor.u32 %v42, %v43
    %v45 = vshll.u32 2131351028, %v36
    %v46 = vshrl.u32 2102212464, %v37
    %v47 = vor.u32 %v45, %v46
    %v48 = vshll.u32 2102212464, %v36
    %v49 = vshrl.u32 920167782, %v37
    %v50 = vor.u32 %v48, %v49
    %v51 = vshll.u32 920167782, %v36
    %v52 = vshrl.u32 1326507024, %v37
    %v53 = vor.u32 %v51, %v52
    %vm54 = vcmp.lt.s32.totalorder %v35, 1
    %vm55 = vcmp.lt.s32.totalorder %v35, 2
    %vm56 = vcmp.lt.s32.totalorder %v35, 3
    %vm57 = vcmp.lt.s32.totalorder %v35, 4
    %v58 = vsel %vm54, %v38, %v41
    %v59 = vsel %vm57, %v47, 2102212464
    %v60 = vsel %vm56, %v44, %v59
    %v61 = vsel %vm55, %v58, %v60
    %v62 = vsel %vm54, %v41, %v44
    %v63 = vsel %vm57, %v50, 920167782
    %v64 = vsel %vm56, %v47, %v63
    %v65 = vsel %vm55, %v62, %v64
    %v66 = vsel %vm54, %v44, %v47
    %v67 = vsel %vm57, %v53, 1326507024
    %v68 = vsel %vm56, %v50, %v67
    %v69 = vsel %vm55, %v66, %v68
    %v70 = vshll.u32 %v30, 8
    %v71 = vmul.u32.u64.compose %v70, %v69
    %v72 = vextract.low.u32 %v71
    %v73 = vextract.high.u32 %v71
    %v74 = vmul.u32.u64.compose %v70, %v65
    %v75 = vextract.low.u32 %v74
    %v76 = vextract.high.u32 %v74
    %v77 = vmul.u32 %v70, %v61
    %v78 = vadd.s32 %v73, %v75
    %vm79 = vc.u32 %v73, %v75
    %v80 = vadd.s32 %v76, 1
    %v81 = vsel %vm79, %v80, %v76
    %v82 = vadd.s32 %v77, %v81
    %v83 = vadd.s32 %v82, 536870912
    %v84 = vshrl.u32 %v83, 30
    %v85 = vshll.u32 %v84, 30
    %v86 = vsub.s32 %v82, %v85
    %vm87 = vcmp.lt.s32.totalorder %v86, 0
    %v88 = vsub.s32 0, %v86
    %v89 = vsel %vm87, %v88, %v86
    %v90 = vclz %v89
    %v91 = vsub.s32 %v90, 2
    %vm92 = vcmp.gt.s32.totalorder 0, %v91
    %v93 = vsel %vm92, 0, %v91
    %v94 = vsub.s32 32, %v93
    %v95 = vshll.u32 %v86, %v93
    %v96 = vshrl.u32 %v78, %v94
    %v97 = vor.u32 %v95, %v96
    %v98 = vsub.s32 4294967266, %v93
    %v99 = vadd.s32 %v98, 127
    %v100 = vshll.u32 %v99, 23
    %v101 = vor.u32 4788187, %v100
    %v102 = vand.u32 2147483647, %v101
    %v104 = vcvt.s32.f32 %v97
    %v105 = vmul.f32 %v104, %v102
    %v106 = vxor.u32 %v105, 2147483648
    %v107 = vsel %vm24, %v106, %v105
    %v108 = vsub.s32 4, %v84
    %v109 = vsel %vm24, %v108, %v84
    %v110 = vsel %vm23, %v20, %v107
    %v111 = vsel %vm23, 0, %v109
    %v112 = vcosq.f32.pop %v110
    %v113 = vsinq.f32.pop %v110
    %vm114 = vweird.f32 %v20
    %v115 = vadd.s32 %v111, 3
    %v116 = vand.u32 %v115, 3
    %vm117 = vcmp.lt.s32.totalorder %v116, 2
    %vm118 = vcmp.eq.s32.totalorder %v116, 0
    %v119 = vxor.u32 %v113, 2147483648
    %v120 = vsel %vm118, %v112, %v119
    %vm121 = vcmp.eq.s32.totalorder %v116, 2
    %v122 = vxor.u32 %v112, 2147483648
    %v123 = vsel %vm121, %v122, %v113
    %v124 = vsel %vm117, %v120, %v123
    %v125 = vsel %vm114, nan, %v124
    %v126 = vand.u32 2147483647, %v21
    %vm127 = vcmp.le.f32.partialorder %v126, 0.7853982
    %vm128 = vcmp.lt.s32.totalorder %v21, 0
    %v129 = vand.u32 %v21, 2139095040
    %v130 = vshrl.u32 %v129, 23
    %v131 = vsub.s32 %v130, 127
    %v132 = vand.u32 2147483647, %v21
    %v133 = vand.u32 %v132, 8388607
    %v134 = vor.u32 %v133, 8388608
    %v135 = vsub.s32 0, %v134
    %v136 = vadd.s32 %v131, 1
    %vm137 = vcmp.gt.s32.totalorder %v136, 0
    %v138 = vsel %vm137, %v136, 0
    %v139 = vshrl.u32 %v138, 5
    %v140 = vand.u32 %v138, 31
    %v141 = vsub.s32 32, %v140
    %v142 = vshrl.u32 683565275, %v141
    %v143 = vshll.u32 683565275, %v140
    %v144 = vshrl.u32 2475754826, %v141
    %v145 = vor.u32 %v143, %v144
    %v146 = vshll.u32 2475754826, %v140
    %v147 = vshrl.u32 2131351028, %v141
    %v148 = vor.u32 %v146, %v147
    %v149 = vshll.u32 2131351028, %v140
    %v150 = vshrl.u32 2102212464, %v141
    %v151 = vor.u32 %v149, %v150
    %v152 = vshll.u32 2102212464, %v140
    %v153 = vshrl.u32 920167782, %v141
    %v154 = vor.u32 %v152, %v153
    %v155 = vshll.u32 920167782, %v140
    %v156 = vshrl.u32 1326507024, %v141
    %v157 = vor.u32 %v155, %v156
    %vm158 = vcmp.lt.s32.totalorder %v139, 1
    %vm159 = vcmp.lt.s32.totalorder %v139, 2
    %vm160 = vcmp.lt.s32.totalorder %v139, 3
    %vm161 = vcmp.lt.s32.totalorder %v139, 4
    %v162 = vsel %vm158, %v142, %v145
    %v163 = vsel %vm161, %v151, 2102212464
    %v164 = vsel %vm160, %v148, %v163
    %v165 = vsel %vm159, %v162, %v164
    %v166 = vsel %vm158, %v145, %v148
    %v167 = vsel %vm161, %v154, 920167782
    %v168 = vsel %vm160, %v151, %v167
    %v169 = vsel %vm159, %v166, %v168
    %v170 = vsel %vm158, %v148, %v151
    %v171 = vsel %vm161, %v157, 1326507024
    %v172 = vsel %vm160, %v154, %v171
    %v173 = vsel %vm159, %v170, %v172
    %v174 = vshll.u32 %v134, 8
    %v175 = vmul.u32.u64.compose %v174, %v173
    %v176 = vextract.low.u32 %v175
    %v177 = vextract.high.u32 %v175
    %v178 = vmul.u32.u64.compose %v174, %v169
    %v179 = vextract.low.u32 %v178
    %v180 = vextract.high.u32 %v178
    %v181 = vmul.u32 %v174, %v165
    %v182 = vadd.s32 %v177, %v179
    %vm183 = vc.u32 %v177, %v179
    %v184 = vadd.s32 %v180, 1
    %v185 = vsel %vm183, %v184, %v180
    %v186 = vadd.s32 %v181, %v185
    %v187 = vadd.s32 %v186, 536870912
    %v188 = vshrl.u32 %v187, 30
    %v189 = vshll.u32 %v188, 30
    %v190 = vsub.s32 %v186, %v189
    %vm191 = vcmp.lt.s32.totalorder %v190, 0
    %v192 = vsub.s32 0, %v190
    %v193 = vsel %vm191, %v192, %v190
    %v194 = vclz %v193
    %v195 = vsub.s32 %v194, 2
    %vm196 = vcmp.gt.s32.totalorder 0, %v195
    %v197 = vsel %vm196, 0, %v195
    %v198 = vsub.s32 32, %v197
    %v199 = vshll.u32 %v190, %v197
    %v200 = vshrl.u32 %v182, %v198
    %v201 = vor.u32 %v199, %v200
    %v202 = vsub.s32 4294967266, %v197
    %v203 = vadd.s32 %v202, 127
    %v204 = vshll.u32 %v203, 23
    %v205 = vor.u32 4788187, %v204
    %v206 = vand.u32 2147483647, %v205
    %v208 = vcvt.s32.f32 %v201
    %v209 = vmul.f32 %v208, %v206
    %v210 = vxor.u32 %v209, 2147483648
    %v211 = vsel %vm128, %v210, %v209
    %v212 = vsub.s32 4, %v188
    %v213 = vsel %vm128, %v212, %v188
    %v214 = vsel %vm127, %v21, %v211
    %v215 = vsel %vm127, 0, %v213
    %v216 = vcosq.f32.pop %v214
    %v217 = vsinq.f32.pop %v214
    %vm218 = vweird.f32 %v21
    %v219 = vadd.s32 %v215, 3
    %v220 = vand.u32 %v219, 3
    %vm221 = vcmp.lt.s32.totalorder %v220, 2
    %vm222 = vcmp.eq.s32.totalorder %v220, 0
    %v223 = vxor.u32 %v217, 2147483648
    %v224 = vsel %vm222, %v216, %v223
    %vm225 = vcmp.eq.s32.totalorder %v220, 2
    %v226 = vxor.u32 %v216, 2147483648
    %v227 = vsel %vm225, %v226, %v217
    %v228 = vsel %vm221, %v224, %v227
    %v229 = vsel %vm218, nan, %v228
    %v230 = vand.u32 2147483647, %v20
    %vm231 = vcmp.le.f32.partialorder %v230, 0.7853982
    %vm232 = vcmp.lt.s32.totalorder %v20, 0
    %v233 = vand.u32 %v20, 2139095040
    %v234 = vshrl.u32 %v233, 23
    %v235 = vsub.s32 %v234, 127
    %v236 = vand.u32 2147483647, %v20
    %v237 = vand.u32 %v236, 8388607
    %v238 = vor.u32 %v237, 8388608
    %v239 = vsub.s32 0, %v238
    %v240 = vadd.s32 %v235, 1
    %vm241 = vcmp.gt.s32.totalorder %v240, 0
    %v242 = vsel %vm241, %v240, 0
    %v243 = vshrl.u32 %v242, 5
    %v244 = vand.u32 %v242, 31
    %v245 = vsub.s32 32, %v244
    %v246 = vshrl.u32 683565275, %v245
    %v247 = vshll.u32 683565275, %v244
    %v248 = vshrl.u32 2475754826, %v245
    %v249 = vor.u32 %v247, %v248
    %v250 = vshll.u32 2475754826, %v244
    %v251 = vshrl.u32 2131351028, %v245
    %v252 = vor.u32 %v250, %v251
    %v253 = vshll.u32 2131351028, %v244
    %v254 = vshrl.u32 2102212464, %v245
    %v255 = vor.u32 %v253, %v254
    %v256 = vshll.u32 2102212464, %v244
    %v257 = vshrl.u32 920167782, %v245
    %v258 = vor.u32 %v256, %v257
    %v259 = vshll.u32 920167782, %v244
    %v260 = vshrl.u32 1326507024, %v245
    %v261 = vor.u32 %v259, %v260
    %vm262 = vcmp.lt.s32.totalorder %v243, 1
    %vm263 = vcmp.lt.s32.totalorder %v243, 2
    %vm264 = vcmp.lt.s32.totalorder %v243, 3
    %vm265 = vcmp.lt.s32.totalorder %v243, 4
    %v266 = vsel %vm262, %v246, %v249
    %v267 = vsel %vm265, %v255, 2102212464
    %v268 = vsel %vm264, %v252, %v267
    %v269 = vsel %vm263, %v266, %v268
    %v270 = vsel %vm262, %v249, %v252
    %v271 = vsel %vm265, %v258, 920167782
    %v272 = vsel %vm264, %v255, %v271
    %v273 = vsel %vm263, %v270, %v272
    %v274 = vsel %vm262, %v252, %v255
    %v275 = vsel %vm265, %v261, 1326507024
    %v276 = vsel %vm264, %v258, %v275
    %v277 = vsel %vm263, %v274, %v276
    %v278 = vshll.u32 %v238, 8
    %v279 = vmul.u32.u64.compose %v278, %v277
    %v280 = vextract.low.u32 %v279
    %v281 = vextract.high.u32 %v279
    %v282 = vmul.u32.u64.compose %v278, %v273
    %v283 = vextract.low.u32 %v282
    %v284 = vextract.high.u32 %v282
    %v285 = vmul.u32 %v278, %v269
    %v286 = vadd.s32 %v281, %v283
    %vm287 = vc.u32 %v281, %v283
    %v288 = vadd.s32 %v284, 1
    %v289 = vsel %vm287, %v288, %v284
    %v290 = vadd.s32 %v285, %v289
    %v291 = vadd.s32 %v290, 536870912
    %v292 = vshrl.u32 %v291, 30
    %v293 = vshll.u32 %v292, 30
    %v294 = vsub.s32 %v290, %v293
    %vm295 = vcmp.lt.s32.totalorder %v294, 0
    %v296 = vsub.s32 0, %v294
    %v297 = vsel %vm295, %v296, %v294
    %v298 = vclz %v297
    %v299 = vsub.s32 %v298, 2
    %vm300 = vcmp.gt.s32.totalorder 0, %v299
    %v301 = vsel %vm300, 0, %v299
    %v302 = vsub.s32 32, %v301
    %v303 = vshll.u32 %v294, %v301
    %v304 = vshrl.u32 %v286, %v302
    %v305 = vor.u32 %v303, %v304
    %v306 = vsub.s32 4294967266, %v301
    %v307 = vadd.s32 %v306, 127
    %v308 = vshll.u32 %v307, 23
    %v309 = vor.u32 4788187, %v308
    %v310 = vand.u32 2147483647, %v309
    %v312 = vcvt.s32.f32 %v305
    %v313 = vmul.f32 %v312, %v310
    %v314 = vxor.u32 %v313, 2147483648
    %v315 = vsel %vm232, %v314, %v313
    %v316 = vsub.s32 4, %v292
    %v317 = vsel %vm232, %v316, %v292
    %v318 = vsel %vm231, %v20, %v315
    %v319 = vsel %vm231, 0, %v317
    %v320 = vcosq.f32.pop %v318
    %v321 = vsinq.f32.pop %v318
    %vm322 = vweird.f32 %v20
    %v323 = vand.u32 %v319, 3
    %vm324 = vcmp.lt.s32.totalorder %v323, 2
    %vm325 = vcmp.eq.s32.totalorder %v323, 0
    %v326 = vxor.u32 %v321, 2147483648
    %v327 = vsel %vm325, %v320, %v326
    %vm328 = vcmp.eq.s32.totalorder %v323, 2
    %v329 = vxor.u32 %v320, 2147483648
    %v330 = vsel %vm328, %v329, %v321
    %v331 = vsel %vm324, %v327, %v330
    %v332 = vsel %vm322, nan, %v331
    %v333 = vand.u32 2147483647, %v21
    %vm334 = vcmp.le.f32.partialorder %v333, 0.7853982
    %vm335 = vcmp.lt.s32.totalorder %v21, 0
    %v336 = vand.u32 %v21, 2139095040
    %v337 = vshrl.u32 %v336, 23
    %v338 = vsub.s32 %v337, 127
    %v339 = vand.u32 2147483647, %v21
    %v340 = vand.u32 %v339, 8388607
    %v341 = vor.u32 %v340, 8388608
    %v342 = vsub.s32 0, %v341
    %v343 = vadd.s32 %v338, 1
    %vm344 = vcmp.gt.s32.totalorder %v343, 0
    %v345 = vsel %vm344, %v343, 0
    %v346 = vshrl.u32 %v345, 5
    %v347 = vand.u32 %v345, 31
    %v348 = vsub.s32 32, %v347
    %v349 = vshrl.u32 683565275, %v348
    %v350 = vshll.u32 683565275, %v347
    %v351 = vshrl.u32 2475754826, %v348
    %v352 = vor.u32 %v350, %v351
    %v353 = vshll.u32 2475754826, %v347
    %v354 = vshrl.u32 2131351028, %v348
    %v355 = vor.u32 %v353, %v354
    %v356 = vshll.u32 2131351028, %v347
    %v357 = vshrl.u32 2102212464, %v348
    %v358 = vor.u32 %v356, %v357
    %v359 = vshll.u32 2102212464, %v347
    %v360 = vshrl.u32 920167782, %v348
    %v361 = vor.u32 %v359, %v360
    %v362 = vshll.u32 920167782, %v347
    %v363 = vshrl.u32 1326507024, %v348
    %v364 = vor.u32 %v362, %v363
    %vm365 = vcmp.lt.s32.totalorder %v346, 1
    %vm366 = vcmp.lt.s32.totalorder %v346, 2
    %vm367 = vcmp.lt.s32.totalorder %v346, 3
    %vm368 = vcmp.lt.s32.totalorder %v346, 4
    %v369 = vsel %vm365, %v349, %v352
    %v370 = vsel %vm368, %v358, 2102212464
    %v371 = vsel %vm367, %v355, %v370
    %v372 = vsel %vm366, %v369, %v371
    %v373 = vsel %vm365, %v352, %v355
    %v374 = vsel %vm368, %v361, 920167782
    %v375 = vsel %vm367, %v358, %v374
    %v376 = vsel %vm366, %v373, %v375
    %v377 = vsel %vm365, %v355, %v358
    %v378 = vsel %vm368, %v364, 1326507024
    %v379 = vsel %vm367, %v361, %v378
    %v380 = vsel %vm366, %v377, %v379
    %v381 = vshll.u32 %v341, 8
    %v382 = vmul.u32.u64.compose %v381, %v380
    %v383 = vextract.low.u32 %v382
    %v384 = vextract.high.u32 %v382
    %v385 = vmul.u32.u64.compose %v381, %v376
    %v386 = vextract.low.u32 %v385
    %v387 = vextract.high.u32 %v385
    %v388 = vmul.u32 %v381, %v372
    %v389 = vadd.s32 %v384, %v386
    %vm390 = vc.u32 %v384, %v386
    %v391 = vadd.s32 %v387, 1
    %v392 = vsel %vm390, %v391, %v387
    %v393 = vadd.s32 %v388, %v392
    %v394 = vadd.s32 %v393, 536870912
    %v395 = vshrl.u32 %v394, 30
    %v396 = vshll.u32 %v395, 30
    %v397 = vsub.s32 %v393, %v396
    %vm398 = vcmp.lt.s32.totalorder %v397, 0
    %v399 = vsub.s32 0, %v397
    %v400 = vsel %vm398, %v399, %v397
    %v401 = vclz %v400
    %v402 = vsub.s32 %v401, 2
    %vm403 = vcmp.gt.s32.totalorder 0, %v402
    %v404 = vsel %vm403, 0, %v402
    %v405 = vsub.s32 32, %v404
    %v406 = vshll.u32 %v397, %v404
    %v407 = vshrl.u32 %v389, %v405
    %v408 = vor.u32 %v406, %v407
    %v409 = vsub.s32 4294967266, %v404
    %v410 = vadd.s32 %v409, 127
    %v411 = vshll.u32 %v410, 23
    %v412 = vor.u32 4788187, %v411
    %v413 = vand.u32 2147483647, %v412
    %v415 = vcvt.s32.f32 %v408
    %v416 = vmul.f32 %v415, %v413
    %v417 = vxor.u32 %v416, 2147483648
    %v418 = vsel %vm335, %v417, %v416
    %v419 = vsub.s32 4, %v395
    %v420 = vsel %vm335, %v419, %v395
    %v421 = vsel %vm334, %v21, %v418
    %v422 = vsel %vm334, 0, %v420
    %v423 = vcosq.f32.pop %v421
    %v424 = vsinq.f32.pop %v421
    %vm425 = vweird.f32 %v21
    %v426 = vand.u32 %v422, 3
    %vm427 = vcmp.lt.s32.totalorder %v426, 2
    %vm428 = vcmp.eq.s32.totalorder %v426, 0
    %v429 = vxor.u32 %v424, 2147483648
    %v430 = vsel %vm428, %v423, %v429
    %vm431 = vcmp.eq.s32.totalorder %v426, 2
    %v432 = vxor.u32 %v423, 2147483648
    %v433 = vsel %vm431, %v432, %v424
    %v434 = vsel %vm427, %v430, %v433
    %v435 = vsel %vm425, nan, %v434
    %v436 = vld [vmem:[%s1] sm:$0x1]
    %438 = vset.pattern.permute.xlu0 0
    %439 = vperm.xlu0 %438, %v125
    %v440 = vpop.permute.xlu0 %439
    %443 = vset.pattern.permute.xlu0 0
    %444 = vperm.xlu0 %443, %v229
    %v445 = vpop.permute.xlu0 %444
    %v448 = vlaneseq
    %v449 = vshrl.u32 %v448, 7
    %v450 = vsub.s32 0, %v449
    %v451 = vrot.slane %v436, %v450
    %v453 = vmul.f32 %v440, %v451
    %v454 = vmul.f32 %v445, %v451
    %v455 = vld [vmem:[%s2] sm:$0x1]
    %457 = vset.pattern.permute.xlu0 0
    %458 = vperm.xlu0 %457, %v332
    %v459 = vpop.permute.xlu0 %458
    %462 = vset.pattern.permute.xlu0 0
    %463 = vperm.xlu0 %462, %v435
    %v464 = vpop.permute.xlu0 %463
    %v467 = vlaneseq
    %v468 = vshrl.u32 %v467, 7
    %v469 = vsub.s32 0, %v468
    %v470 = vrot.slane %v455, %v469
    %v472 = vmul.f32 %v459, %v470
    %v473 = vmul.f32 %v464, %v470
    %v474 = vadd.f32 %v453, %v472
    %v475 = vadd.f32 %v454, %v473
    %v476 = vld [vmem:[%s3] sm:$0x1]
    %v478 = vlaneseq
    %v479 = vshrl.u32 %v478, 7
    %v480 = vsub.s32 0, %v479
    %v481 = vrot.slane %v476, %v480
    %v483 = vadd.f32 %v474, %v481
    %v484 = vadd.f32 %v475, %v481
    %485 = vst [vmem:[#allocation2] sm:$0xff] %v483
    %486 = vst [vmem:[#allocation2 + $0x8] sm:$0xff] %v484
    // Predicated region
    $region18: #{tpu_custom_call.1} parent=1 // pred_check
      _
    $region19: #{tpu_custom_call.1} parent=1 // pred_check_branch
      %488 = sbr.rel (0) target = $region21
    $region20: #{tpu_custom_call.1} parent=1 // pred_region
      %s490 = ssub.s32 256, 256
      %491 = vsyncadd [#allocation3], %s490
      %s492 = sshll.u32 [#allocation2], 4
      %s493 = int_to_ptr.vmem [resolvable:$true] %s492
      %498 = dma.vmem_to_hbm [thread:$0]  %s493, 256, %s4, [#allocation3], 128, 128, 8
    $region21: #{tpu_custom_call.1} parent=1 // pred_fallthru
      _
    // Predicated region
    $region22: #{tpu_custom_call.1} parent=1 // pred_check
      _
    $region23: #{tpu_custom_call.1} parent=1 // pred_check_branch
      %500 = sbr.rel (0) target = $region25
    $region24: #{tpu_custom_call.1} parent=1 // pred_region
      %501 = dma.done [#allocation3], 256
    $region25: #{tpu_custom_call.1} parent=1 // pred_fallthru
      _
    %502 = vsyncpa [#allocation3], 1

</llo_original>
